<compile_context>
chip_gen: v7x
topology: tpu7x:2x2x1
jax: 0.10.0
libtpu: 0.0.40
codegen_flags: <defaults>
</compile_context>

<pallas_src>
import jax
import jax.numpy as jnp
from jax import lax
from jax.experimental import pallas as pl
from jax.experimental.pallas import tpu as pltpu


def _acloss_kernel(logit_ref, target_ref, len_ref, reg_ref):
    # logit_ref : (H, W) — channel 3 of one sample (N and C squeezed by BlockSpec)
    # target_ref: (H, W) int8 class labels
    # len_ref   : (1, 1) partial sum of sqrt(dr^2 + dc^2 + eps) over the valid window
    # reg_ref   : (1, 1) partial sum of region_in + region_out numerator
    p = logit_ref[...].astype(jnp.float32)
    t = target_ref[...].astype(jnp.int32)
    H, W = p.shape

    # ---- length term -------------------------------------------------------
    # torch:  dr[a,b] = (p[a+2,b] - p[a+1,b])^2,  dc[a,b] = (p[a,b+2] - p[a,b+1])^2
    #         for a in [0, H-3], b in [0, W-3]
    # Rolls are circular; the wrap-around rows/cols are masked out below.
    p_r1 = pltpu.roll(p, H - 1, axis=0)   # p_r1[i, j] = p[(i+1) % H, j]
    p_r2 = pltpu.roll(p, H - 2, axis=0)   # p_r2[i, j] = p[(i+2) % H, j]
    p_c1 = pltpu.roll(p, W - 1, axis=1)   # p_c1[i, j] = p[i, (j+1) % W]
    p_c2 = pltpu.roll(p, W - 2, axis=1)   # p_c2[i, j] = p[i, (j+2) % W]

    dr = (p_r2 - p_r1) ** 2
    dc = (p_c2 - p_c1) ** 2
    # abs() of the torch reference is redundant: dr + dc >= 0.
    val = jnp.sqrt(dr + dc + 1e-08)

    row = lax.broadcasted_iota(jnp.int32, (H, W), 0)
    col = lax.broadcasted_iota(jnp.int32, (H, W), 1)
    valid = (row < H - 2) & (col < W - 2)
    len_ref[...] = jnp.sum(jnp.where(valid, val, 0.0), keepdims=True)

    # ---- region term -------------------------------------------------------
    # region_in + region_out == mean(p*(y3-1)^2) + mean((1-p)*y3^2)
    #                        == mean(where(y3 == 1, 1 - p, p))
    reg_ref[...] = jnp.sum(jnp.where(t == 3, 1.0 - p, p), keepdims=True)


def ac_loss(logit, target, weight=10.0):
    """logit: (N, C, H, W) float, target: (N, H, W) integer labels. Returns scalar f32."""
    N, C, H, W = logit.shape
    assert C > 3, "ACLoss hard-codes channel index 3"
    assert H >= 3 and W >= 3

    # Only the (target == 3) indicator is needed; int8 labels are enough
    # (ideally the caller already stores labels in int8).
    target_i8 = target.astype(jnp.int8)

    len_parts, reg_parts = pl.pallas_call(
        _acloss_kernel,
        out_shape=(
            jax.ShapeDtypeStruct((N, 1, 1), jnp.float32),
            jax.ShapeDtypeStruct((N, 1, 1), jnp.float32),
        ),
        grid_spec=pltpu.PrefetchScalarGridSpec(
            num_scalar_prefetch=0,
            grid=(N,),
            in_specs=[
                # Squeeze N and C; fetch only channel 3 of sample n.
                pl.BlockSpec((None, None, H, W), lambda n: (n, 3, 0, 0)),
                pl.BlockSpec((None, H, W), lambda n: (n, 0, 0)),
            ],
            out_specs=(
                pl.BlockSpec((None, 1, 1), lambda n: (n, 0, 0)),
                pl.BlockSpec((None, 1, 1), lambda n: (n, 0, 0)),
            ),
        ),
        compiler_params=pltpu.CompilerParams(
            # Each sample's partial sums are independent -> shard across cores.
            dimension_semantics=("parallel",),
        ),
    )(logit, target_i8)

    length = jnp.sum(len_parts) / (N * (H - 2) * (W - 2))
    region = jnp.sum(reg_parts) / (N * H * W)
    return (weight * length + region).astype(jnp.float32)


def ac_loss_ref(logit, target, weight=10.0):
    """Pure-JAX reference replicating the PyTorch forward."""
    N, C, H, W = logit.shape
    y_true = jax.nn.one_hot(target, C, axis=1, dtype=jnp.float32)  # (N,C,H,W)
    p = logit[:, 3, :, :].astype(jnp.float32)
    y3 = y_true[:, 3, :, :]
    delta_r = p[:, 1:, :] - p[:, :-1, :]
    delta_c = p[:, :, 1:] - p[:, :, :-1]
    dr = delta_r[:, 1:, : W - 2] ** 2
    dc = delta_c[:, : H - 2, 1:] ** 2
    length = jnp.mean(jnp.sqrt(jnp.abs(dr + dc) + 1e-08))
    region_in = jnp.mean(p * (y3 - 1.0) ** 2)
    region_out = jnp.mean((1.0 - p) * y3 ** 2)
    return weight * length + region_in + region_out


if __name__ == "__main__":
    key = jax.random.PRNGKey(0)
    k1, k2 = jax.random.split(key)

    N, C, H, W = 2, 4, 16, 16
    logit = jax.random.uniform(k1, (N, C, H, W), dtype=jnp.float32)   # pseudo-probabilities
    target = jax.random.randint(k2, (N, H, W), 0, C, dtype=jnp.int32)

    loss = ac_loss(logit, target, weight=10.0)
    loss = jax.block_until_ready(loss)

    ref = jax.block_until_ready(ac_loss_ref(logit, target, weight=10.0))
    assert jnp.allclose(loss, ref, rtol=1e-5, atol=1e-5), (loss, ref)

    print("KERNEL_OK")
</pallas_src>

<mosaic_0001>
module attributes {stable_mosaic.version = 11 : i64} {
  func.func @_acloss_kernel(%arg0: i32, %arg1: memref<1x1x16x16xf32, #tpu.memory_space<vmem>>, %arg2: memref<1x16x16xi8, #tpu.memory_space<vmem>>, %arg3: memref<1x1x1xf32, #tpu.memory_space<vmem>>, %arg4: memref<1x1x1xf32, #tpu.memory_space<vmem>>) attributes {dimension_semantics = [#tpu.dimension_semantics<parallel>], iteration_bounds = array<i64: 2>, scalar_prefetch = 0 : i64, scratch_operands = 0 : i64, tpu.core_type = #tpu.core_type<tc>, window_params = [{transform_indices = @transform_0, window_bounds = array<i64: 1, 1, 16, 16>}, {transform_indices = @transform_1, window_bounds = array<i64: 1, 16, 16>}, {transform_indices = @transform_2, window_bounds = array<i64: 1, 1, 1>}, {transform_indices = @transform_3, window_bounds = array<i64: 1, 1, 1>}]} {
    %c0 = arith.constant 0 : index
    %c0_0 = arith.constant 0 : index
    %c0_1 = arith.constant 0 : index
    %c0_2 = arith.constant 0 : index
    %0 = vector.load %arg1[%c0, %c0_0, %c0_1, %c0_2] : memref<1x1x16x16xf32, #tpu.memory_space<vmem>>, vector<1x1x16x16xf32>
    %1 = vector.shape_cast %0 : vector<1x1x16x16xf32> to vector<16x16xf32>
    %c0_3 = arith.constant 0 : index
    %c0_4 = arith.constant 0 : index
    %c0_5 = arith.constant 0 : index
    %2 = vector.load %arg2[%c0_3, %c0_4, %c0_5] : memref<1x16x16xi8, #tpu.memory_space<vmem>>, vector<1x16x16xi8>
    %3 = vector.shape_cast %2 : vector<1x16x16xi8> to vector<16x16xi8>
    %4 = arith.extsi %3 : vector<16x16xi8> to vector<16x16xi32>
    %c15_i32 = arith.constant 15 : i32
    %5 = tpu.dynamic_rotate %1 by %c15_i32 dim 0 : vector<16x16xf32>, i32 -> vector<16x16xf32>
    %c14_i32 = arith.constant 14 : i32
    %6 = tpu.dynamic_rotate %1 by %c14_i32 dim 0 : vector<16x16xf32>, i32 -> vector<16x16xf32>
    %c15_i32_6 = arith.constant 15 : i32
    %7 = tpu.dynamic_rotate %1 by %c15_i32_6 dim 1 : vector<16x16xf32>, i32 -> vector<16x16xf32>
    %c14_i32_7 = arith.constant 14 : i32
    %8 = tpu.dynamic_rotate %1 by %c14_i32_7 dim 1 : vector<16x16xf32>, i32 -> vector<16x16xf32>
    %9 = arith.subf %6, %5 : vector<16x16xf32>
    %10 = arith.mulf %9, %9 : vector<16x16xf32>
    %11 = arith.subf %8, %7 : vector<16x16xf32>
    %12 = arith.mulf %11, %11 : vector<16x16xf32>
    %13 = arith.addf %10, %12 : vector<16x16xf32>
    %cst = arith.constant 9.99999993E-9 : f32
    %14 = vector.broadcast %cst : f32 to vector<16x16xf32>
    %15 = arith.addf %13, %14 : vector<16x16xf32>
    %16 = math.sqrt %15 : vector<16x16xf32>
    %17 = tpu.iota {dimensions = array<i32: 0>} : vector<16x16xi32>
    %18 = tpu.iota {dimensions = array<i32: 1>} : vector<16x16xi32>
    %c14_i32_8 = arith.constant 14 : i32
    %19 = vector.broadcast %c14_i32_8 : i32 to vector<16x16xi32>
    %20 = arith.cmpi slt, %17, %19 : vector<16x16xi32>
    %c14_i32_9 = arith.constant 14 : i32
    %21 = vector.broadcast %c14_i32_9 : i32 to vector<16x16xi32>
    %22 = arith.cmpi slt, %18, %21 : vector<16x16xi32>
    %23 = arith.andi %20, %22 : vector<16x16xi1>
    %cst_10 = arith.constant 0.000000e+00 : f32
    %24 = vector.broadcast %cst_10 : f32 to vector<16x16xf32>
    %25 = arith.select %23, %16, %24 : vector<16x16xi1>, vector<16x16xf32>
    %26 = vector.shape_cast %25 : vector<16x16xf32> to vector<1x16x16xf32>
    %cst_11 = arith.constant dense<0.000000e+00> : vector<1xf32>
    %27 = vector.multi_reduction <add>, %26, %cst_11 [1, 2] : vector<1x16x16xf32> to vector<1xf32>
    %28 = vector.shape_cast %27 : vector<1xf32> to vector<1x1x1xf32>
    %29 = vector.extract %28[0, 0, 0] : f32 from vector<1x1x1xf32>
    %30 = vector.broadcast %29 : f32 to vector<1x1xf32>
    %c0_12 = arith.constant 0 : index
    %c0_13 = arith.constant 0 : index
    %c0_14 = arith.constant 0 : index
    %31 = vector.load %arg3[%c0_12, %c0_13, %c0_14] : memref<1x1x1xf32, #tpu.memory_space<vmem>>, vector<1x1x1xf32>
    %32 = vector.shape_cast %31 : vector<1x1x1xf32> to vector<1x1xf32>
    %33 = vector.shape_cast %30 : vector<1x1xf32> to vector<1x1x1xf32>
    tpu.vector_store %arg3[%c0_12, %c0_13, %c0_14], %33 {strides = array<i32>} : memref<1x1x1xf32, #tpu.memory_space<vmem>>, vector<1x1x1xf32>,
    %c3_i32 = arith.constant 3 : i32
    %34 = vector.broadcast %c3_i32 : i32 to vector<16x16xi32>
    %35 = arith.cmpi eq, %4, %34 : vector<16x16xi32>
    %cst_15 = arith.constant 1.000000e+00 : f32
    %36 = vector.broadcast %cst_15 : f32 to vector<16x16xf32>
    %37 = arith.subf %36, %1 : vector<16x16xf32>
    %38 = arith.select %35, %37, %1 : vector<16x16xi1>, vector<16x16xf32>
    %39 = vector.shape_cast %38 : vector<16x16xf32> to vector<1x16x16xf32>
    %cst_16 = arith.constant dense<0.000000e+00> : vector<1xf32>
    %40 = vector.multi_reduction <add>, %39, %cst_16 [1, 2] : vector<1x16x16xf32> to vector<1xf32>
    %41 = vector.shape_cast %40 : vector<1xf32> to vector<1x1x1xf32>
    %42 = vector.extract %41[0, 0, 0] : f32 from vector<1x1x1xf32>
    %43 = vector.broadcast %42 : f32 to vector<1x1xf32>
    %c0_17 = arith.constant 0 : index
    %c0_18 = arith.constant 0 : index
    %c0_19 = arith.constant 0 : index
    %44 = vector.load %arg4[%c0_17, %c0_18, %c0_19] : memref<1x1x1xf32, #tpu.memory_space<vmem>>, vector<1x1x1xf32>
    %45 = vector.shape_cast %44 : vector<1x1x1xf32> to vector<1x1xf32>
    %46 = vector.shape_cast %43 : vector<1x1xf32> to vector<1x1x1xf32>
    tpu.vector_store %arg4[%c0_17, %c0_18, %c0_19], %46 {strides = array<i32>} : memref<1x1x1xf32, #tpu.memory_space<vmem>>, vector<1x1x1xf32>,
    return
  }
  func.func @transform_0(%arg0: i32) -> (i32, i32, i32, i32) {
    %c3_i32 = arith.constant 3 : i32
    %c0_i32 = arith.constant 0 : i32
    %c0_i32_0 = arith.constant 0 : i32
    %c0_i32_1 = arith.constant 0 : i32
    return %arg0, %c3_i32, %c0_i32, %c0_i32_0 : i32, i32, i32, i32
  }
  func.func @transform_1(%arg0: i32) -> (i32, i32, i32) {
    %c0_i32 = arith.constant 0 : i32
    %c0_i32_0 = arith.constant 0 : i32
    %c0_i32_1 = arith.constant 0 : i32
    return %arg0, %c0_i32, %c0_i32_0 : i32, i32, i32
  }
  func.func @transform_2(%arg0: i32) -> (i32, i32, i32) {
    %c0_i32 = arith.constant 0 : i32
    %c0_i32_0 = arith.constant 0 : i32
    %c0_i32_1 = arith.constant 0 : i32
    return %arg0, %c0_i32, %c0_i32_0 : i32, i32, i32
  }
  func.func @transform_3(%arg0: i32) -> (i32, i32, i32) {
    %c0_i32 = arith.constant 0 : i32
    %c0_i32_0 = arith.constant 0 : i32
    %c0_i32_1 = arith.constant 0 : i32
    return %arg0, %c0_i32, %c0_i32_0 : i32, i32, i32
  }
}

</mosaic_0001>

<llo_original>
// kernel: tpu_custom_call.1
$region0: #{tpu_custom_call.1}
  #allocation0 [shape = 'u32[]', space=smem, size = 0x4, offset = 0x4, fixed_abs, tag = 'smem constant byte address 0x4 - core index']
  #allocation1 [shape = 'u32[144,128]{1,0:T(1,128)}', space=vmem, size = 0x12000, scoped, tag = 'internal scratch']
  %s0 = inlined_call_operand.hbm [shape: f32[2,4,16,16], index: 0, kind: input, shape index: {}]
  %s1 = inlined_call_operand.hbm [shape: s8[2,16,16], index: 1, kind: input, shape index: {}]
  %s2 = inlined_call_operand.vmem [shape: f32[2,1,1], index: 2, kind: output, shape index: {0}]
  %s3 = inlined_call_operand.vmem [shape: f32[2,1,1], index: 3, kind: output, shape index: {1}]
  %4 = xla_tuple %s2, %s3
  %s5 = sld [smem:[#allocation0]]
  $region57: #{tpu_custom_call.1} parent=0
    _
  %s7 = ssub.s32 1, %s5
  %s8 = scalar_select 0, %s7, %s5
  $region1: #{tpu_custom_call.1} parent=0
    #allocation2 [shape = 'u8[16384]{0}', space=vmem, size = 0x4000, scoped, tag = 'input window, operand 0']
    #allocation3 [shape = 's32[2]{0}', space=sflag, size = 0x8, scoped, tag = 'scoped memory for tpu_custom_call.1']
    #allocation4 [shape = 'u8[4096]{0}', space=vmem, size = 0x1000, scoped, tag = 'input window, operand 1']
    #allocation5 [shape = 's32[2]{0}', space=sflag, size = 0x8, scoped, tag = 'scoped memory for tpu_custom_call.1']
    %9 = vsyncpa [#allocation3], 0
    %s10 = scalar_lea.sflag [#allocation3], 1
    %11 = vsyncpa %s10, 0
    %12 = vsyncpa [#allocation5], 0
    %s13 = scalar_lea.sflag [#allocation5], 1
    %14 = vsyncpa %s13, 0
    loop: start=0, step=1, limit=4
    $region2: #{tpu_custom_call.1} parent=1 // loop_pre_header
      _
    $region3: #{tpu_custom_call.1} parent=1 // loop_header
      %s16 = sphi 0, %s20
      %p17 = scmp.ge.s32.totalorder %s16, 4
      %s26 = sphi 0, %s28
      %s29 = sphi 0, %s26
      %s30 = sphi 0, %s29
      %s46 = sphi 0, %s30
      %s52 = sphi 0, %s54
      %s55 = sphi 0, %s52
      %s56 = sphi 0, %s55
      %s72 = sphi 0, %s56
      %s78 = sphi 0, %s80
      %s81 = sphi 0, %s78
      %s82 = sphi 0, %s81
      %s98 = sphi 0, %s82
      %s104 = sphi 0, %s106
      %s107 = sphi 0, %s104
      %s108 = sphi 0, %s107
      %s124 = sphi 0, %s108
    $region4: #{tpu_custom_call.1} parent=1 // loop_header_branch
      %19 = sbr.rel (%p17) target = $region8
    $region5: #{tpu_custom_call.1} parent=1 // loop_body
      %s21 = ssub.s32 %s16, 1
      %s22 = ssub.s32 %s16, 2
      %s23 = sadd.s32 %s16, 1
      %s24 = ssub.s32 %s16, %s23
      %p25 = scmp.eq.s32.totalorder %s24, 0
      %s27 = sadd.s32 %s26, 1
      %s28 = scalar_select %p25, %s26, %s27
      %p31 = pneg %p25
      %p32 = scmp.eq.s32.totalorder %s16, 1
      %p33 = por %p31, %p32
      %p34 = scmp.ne.s32.totalorder %s26, %s29
      %p35 = scmp.eq.s32.totalorder %s16, 0
      %p36 = por %p34, %p35
      %p37 = scmp.ne.s32.totalorder %s26, %s29
      %p38 = scmp.eq.s32.totalorder %s21, 1
      %p39 = por %p37, %p38
      %p40 = scmp.ne.s32.totalorder %s29, %s30
      %p41 = scmp.eq.s32.totalorder %s21, 0
      %p42 = por %p40, %p41
      %p43 = scmp.ne.s32.totalorder %s29, %s30
      %p44 = scmp.eq.s32.totalorder %s22, 1
      %p45 = por %p43, %p44
      %p47 = scmp.ne.s32.totalorder %s30, %s46
      %p48 = scmp.eq.s32.totalorder %s22, 0
      %p49 = por %p47, %p48
      %s50 = ssub.s32 %s16, %s23
      %p51 = scmp.eq.s32.totalorder %s50, 0
      %s53 = sadd.s32 %s52, 1
      %s54 = scalar_select %p51, %s52, %s53
      %p57 = pneg %p51
      %p58 = scmp.eq.s32.totalorder %s16, 1
      %p59 = por %p57, %p58
      %p60 = scmp.ne.s32.totalorder %s52, %s55
      %p61 = scmp.eq.s32.totalorder %s16, 0
      %p62 = por %p60, %p61
      %p63 = scmp.ne.s32.totalorder %s52, %s55
      %p64 = scmp.eq.s32.totalorder %s21, 1
      %p65 = por %p63, %p64
      %p66 = scmp.ne.s32.totalorder %s55, %s56
      %p67 = scmp.eq.s32.totalorder %s21, 0
      %p68 = por %p66, %p67
      %p69 = scmp.ne.s32.totalorder %s55, %s56
      %p70 = scmp.eq.s32.totalorder %s22, 1
      %p71 = por %p69, %p70
      %p73 = scmp.ne.s32.totalorder %s56, %s72
      %p74 = scmp.eq.s32.totalorder %s22, 0
      %p75 = por %p73, %p74
      %s76 = ssub.s32 %s16, %s23
      %p77 = scmp.eq.s32.totalorder %s76, 0
      %s79 = sadd.s32 %s78, 1
      %s80 = scalar_select %p77, %s78, %s79
      %p83 = pneg %p77
      %p84 = scmp.eq.s32.totalorder %s16, 1
      %p85 = por %p83, %p84
      %p86 = scmp.ne.s32.totalorder %s78, %s81
      %p87 = scmp.eq.s32.totalorder %s16, 0
      %p88 = por %p86, %p87
      %p89 = scmp.ne.s32.totalorder %s78, %s81
      %p90 = scmp.eq.s32.totalorder %s21, 1
      %p91 = por %p89, %p90
      %p92 = scmp.ne.s32.totalorder %s81, %s82
      %p93 = scmp.eq.s32.totalorder %s21, 0
      %p94 = por %p92, %p93
      %p95 = scmp.ne.s32.totalorder %s81, %s82
      %p96 = scmp.eq.s32.totalorder %s22, 1
      %p97 = por %p95, %p96
      %p99 = scmp.ne.s32.totalorder %s82, %s98
      %p100 = scmp.eq.s32.totalorder %s22, 0
      %p101 = por %p99, %p100
      %s102 = ssub.s32 %s16, %s23
      %p103 = scmp.eq.s32.totalorder %s102, 0
      %s105 = sadd.s32 %s104, 1
      %s106 = scalar_select %p103, %s104, %s105
      %p109 = pneg %p103
      %p110 = scmp.eq.s32.totalorder %s16, 1
      %p111 = por %p109, %p110
      %p112 = scmp.ne.s32.totalorder %s104, %s107
      %p113 = scmp.eq.s32.totalorder %s16, 0
      %p114 = por %p112, %p113
      %p115 = scmp.ne.s32.totalorder %s104, %s107
      %p116 = scmp.eq.s32.totalorder %s21, 1
      %p117 = por %p115, %p116
      %p118 = scmp.ne.s32.totalorder %s107, %s108
      %p119 = scmp.eq.s32.totalorder %s21, 0
      %p120 = por %p118, %p119
      %p121 = scmp.ne.s32.totalorder %s107, %s108
      %p122 = scmp.eq.s32.totalorder %s22, 1
      %p123 = por %p121, %p122
      %p125 = scmp.ne.s32.totalorder %s108, %s124
      %p126 = scmp.eq.s32.totalorder %s22, 0
      %p127 = por %p125, %p126
      %p128 = scmp.le.s32.totalorder 1, %s16
      %p129 = scmp.lt.s32.totalorder %s16, 3
      %p130 = pnand %p128, %p129
      %p131 = pneg %p130
      // Predicated region
      $region9: #{tpu_custom_call.1} parent=5 // pred_check
        _
      $region10: #{tpu_custom_call.1} parent=5 // pred_check_branch
        %133 = sbr.rel (%p130) target = $region12
      $region11: #{tpu_custom_call.1} parent=5 // pred_region
        %s134 = ssub.s32 %s16, 1
      $region12: #{tpu_custom_call.1} parent=5 // pred_fallthru
        _
      %p135 = scmp.lt.s32.totalorder %s16, 2
      // Predicated region
      $region13: #{tpu_custom_call.1} parent=5 // pred_check
        %p136 = pneg %p135
      $region14: #{tpu_custom_call.1} parent=5 // pred_check_branch
        %138 = sbr.rel (%p136) target = $region16
      $region15: #{tpu_custom_call.1} parent=5 // pred_region
        // Predicated region
        $region17: #{tpu_custom_call.1} parent=15 // pred_check
          %p139 = pneg %p36
        $region18: #{tpu_custom_call.1} parent=15 // pred_check_branch
          %141 = sbr.rel (%p139) target = $region20
        $region19: #{tpu_custom_call.1} parent=15 // pred_region
          %s142 = sand.u32 %s26, 1
          %s143 = scalar_lea.sflag [#allocation3], %s142
          %s144 = sand.u32 %s26, 1
          %s145 = smul.addr %s144, 16
          %s146 = scalar_lea.vmem [#allocation2], %s145
          %s148 = ssub.s32 256, 256
          %149 = vsyncadd %s143, %s148
          %s150 = smul.addr %s16, 8
          %s151 = sadd.s32 6, %s150
          %s152 = smul.addr %s151, 128
          %s153 = scalar_lea.hbm %s0, %s152
          %s154 = sshll.u32 %s146, 4
          %s155 = int_to_ptr.vmem [resolvable:$true] %s154
          %160 = dma.hbm_to_vmem [thread:$0]  %s153, 256, %s155, %s143, 128, 128, 8
        $region20: #{tpu_custom_call.1} parent=15 // pred_fallthru
          _
        // Predicated region
        $region21: #{tpu_custom_call.1} parent=15 // pred_check
          %p161 = pneg %p62
        $region22: #{tpu_custom_call.1} parent=15 // pred_check_branch
          %163 = sbr.rel (%p161) target = $region24
        $region23: #{tpu_custom_call.1} parent=15 // pred_region
          %s164 = sand.u32 %s52, 1
          %s165 = scalar_lea.sflag [#allocation5], %s164
          %s166 = sand.u32 %s52, 1
          %s167 = smul.addr %s166, 4
          %s168 = scalar_lea.vmem [#allocation4], %s167
          %s170 = ssub.s32 64, 64
          %171 = vsyncadd %s165, %s170
          %s172 = smul.addr %s16, 2
          %s173 = smul.addr %s172, 32
          %s174 = scalar_lea.hbm %s1, %s173
          %s175 = sshll.u32 %s168, 4
          %s176 = int_to_ptr.vmem [resolvable:$true] %s175
          %181 = dma.hbm_to_vmem [thread:$0]  %s174, 64, %s176, %s165, 32, 32, 2
        $region24: #{tpu_custom_call.1} parent=15 // pred_fallthru
          _
      $region16: #{tpu_custom_call.1} parent=5 // pred_fallthru
        _
      %p182 = scmp.le.s32.totalorder 1, %s16
      %p183 = scmp.lt.s32.totalorder %s16, 3
      %p184 = pnand %p182, %p183
      %p185 = pneg %p184
      // Predicated region
      $region25: #{tpu_custom_call.1} parent=5 // pred_check
        _
      $region26: #{tpu_custom_call.1} parent=5 // pred_check_branch
        %187 = sbr.rel (%p184) target = $region28
      $region27: #{tpu_custom_call.1} parent=5 // pred_region
        %s188 = ssub.s32 %s16, 1
        %s189 = sand.u32 %s29, 1
        %s190 = scalar_lea.sflag [#allocation3], %s189
        %s191 = sand.u32 %s29, 1
        %s192 = smul.addr %s191, 16
        %s193 = scalar_lea.vmem [#allocation2], %s192
        // Predicated region
        $region29: #{tpu_custom_call.1} parent=27 // pred_check
          %p194 = pneg %p42
        $region30: #{tpu_custom_call.1} parent=27 // pred_check_branch
          %196 = sbr.rel (%p194) target = $region32
        $region31: #{tpu_custom_call.1} parent=27 // pred_region
          %197 = dma.done %s190, 256
        $region32: #{tpu_custom_call.1} parent=27 // pred_fallthru
          _
        %s198 = sand.u32 %s55, 1
        %s199 = scalar_lea.sflag [#allocation5], %s198
        %s200 = sand.u32 %s55, 1
        %s201 = smul.addr %s200, 4
        %s202 = scalar_lea.vmem [#allocation4], %s201
        // Predicated region
        $region33: #{tpu_custom_call.1} parent=27 // pred_check
          %p203 = pneg %p68
        $region34: #{tpu_custom_call.1} parent=27 // pred_check_branch
          %205 = sbr.rel (%p203) target = $region36
        $region35: #{tpu_custom_call.1} parent=27 // pred_region
          %206 = dma.done %s199, 64
        $region36: #{tpu_custom_call.1} parent=27 // pred_fallthru
          _
        %s207 = sand.u32 %s29, 1
        %s208 = scalar_lea.sflag [#allocation3], %s207
        %s209 = sand.u32 %s29, 1
        %s210 = smul.addr %s209, 16
        %s211 = scalar_lea.vmem [#allocation2], %s210
        %p212 = pneg %p42
        %p213 = pneg %p39
        %s214 = sand.u32 %s55, 1
        %s215 = scalar_lea.sflag [#allocation5], %s214
        %s216 = sand.u32 %s55, 1
        %s217 = smul.addr %s216, 4
        %s218 = scalar_lea.vmem [#allocation4], %s217
        %p219 = pneg %p68
        %p220 = pneg %p65
        %p221 = pneg %p94
        %p222 = pneg %p91
        %p223 = scmp.lt.s32.totalorder %s21, 1
        %s224 = scalar_select %p223, %s21, 1
        %s225 = scalar_lea.vmem %s2, %s224
        %p226 = pneg %p120
        %p227 = pneg %p117
        %p228 = scmp.lt.s32.totalorder %s21, 1
        %s229 = scalar_select %p228, %s21, 1
        %s230 = scalar_lea.vmem %s3, %s229
        %p231 = scmp.lt.s32.totalorder %s21, 1
        %s232 = scalar_select %p231, %s21, 1
        %s233 = scalar_lea.vmem %s2, %s232
        %p234 = scmp.lt.s32.totalorder %s21, 1
        %s235 = scalar_select %p234, %s21, 1
        %s236 = scalar_lea.vmem %s3, %s235
        %v237 = vld [vmem:[%s193] sm:$0xff]
        %v238 = vld [vmem:[%s193 + $0x8] sm:$0xff]
        %v239 = vld [vmem:[%s202] sm:$0x3]
        %v240 = vld [vmem:[%s202 + $0x2] sm:$0x3]
        %v241 = vunpack.c.0.s8 %v239
        %v242 = vunpack.c.0.s8 %v240
        %v243 = vrot.slane %v237, 1
        %v244 = vrot.slane %v238, 1
        %v245 = vlaneseq
        %v246 = vshrl.u32 %v245, 7
        %vm247 = vcmp.lt.s32.totalorder %v246, 7
        %v248 = vsel %vm247, %v243, %v244
        %v249 = vsel %vm247, %v244, %v243
        %v250 = vrot.slane %v237, 2
        %v251 = vrot.slane %v238, 2
        %vm252 = vcmp.lt.s32.totalorder %v246, 6
        %v253 = vsel %vm252, %v250, %v251
        %v254 = vsel %vm252, %v251, %v250
        %vm255 = vcmask 1047680
        %256 = vrot.lane.b32.xlu0 %v237, 16
        %v257 = vpop.permute.xlu0 %256
        %v258 = vsel %vm255, %v257, %v237
        %259 = vrot.lane.b32.xlu0 %v238, 16
        %v260 = vpop.permute.xlu0 %259
        %v261 = vsel %vm255, %v260, %v238
        %262 = vrot.lane.b32.xlu0 %v258, 16
        %v263 = vpop.permute.xlu0 %262
        %264 = vrot.lane.b32.xlu0 %v261, 16
        %v265 = vpop.permute.xlu0 %264
        %v266 = vsel %vm255, %v263, %v237
        %v267 = vsel %vm255, %v265, %v238
        %v268 = vsub.f32 %v253, %v248
        %v269 = vsub.f32 %v254, %v249
        %v270 = vmul.f32 %v268, %v268
        %v271 = vmul.f32 %v269, %v269
        %274 = vrot.lane.b32.xlu0 %v266, 1
        %v275 = vpop.permute.xlu0 %274
        %276 = vrot.lane.b32.xlu0 %v267, 1
        %v277 = vpop.permute.xlu0 %276
        %v280 = vsub.f32 %v266, %v275
        %v281 = vsub.f32 %v267, %v277
        %v282 = vmul.f32 %v280, %v280
        %v283 = vmul.f32 %v281, %v281
        %286 = vrot.lane.b32.xlu0 %v282, 126
        %v287 = vpop.permute.xlu0 %286
        %288 = vrot.lane.b32.xlu0 %v283, 126
        %v289 = vpop.permute.xlu0 %288
        %v292 = vadd.f32 %v270, %v287
        %v293 = vadd.f32 %v271, %v289
        %v294 = vadd.f32 %v292, 1e-08
        %v295 = vadd.f32 %v293, 1e-08
        %v296 = vrsqrt.pop %v294
        %v297 = vmul.f32 %v294, %v296
        %vm298 = vcmp.eq.f32.partialorder %v294, inf
        %v299 = vsel %vm298, %v294, %v297
        %vm300 = vcmp.eq.f32.partialorder %v294, 0.0
        %v301 = vand.u32 %v294, 2147483648
        %v302 = vsel %vm300, %v301, %v299
        %v303 = vrsqrt.pop %v295
        %v304 = vmul.f32 %v295, %v303
        %vm305 = vcmp.eq.f32.partialorder %v295, inf
        %v306 = vsel %vm305, %v295, %v304
        %vm307 = vcmp.eq.f32.partialorder %v295, 0.0
        %v308 = vand.u32 %v295, 2147483648
        %v309 = vsel %vm307, %v308, %v306
        %v310 = vadd.s32 %v246, 8
        %v311 = vlaneseq
        %v312 = vand.u32 %v311, 127
        %vm313 = vcmp.lt.s32.totalorder %v246, 14
        %vm314 = vcmp.lt.s32.totalorder %v310, 14
        %vm315 = vcmp.lt.s32.totalorder %v312, 14
        %vm316 = vmand %vm313, %vm315
        %vm317 = vmand %vm314, %vm315
        %v318 = vsel %vm316, %v302, 0.0
        %v319 = vsel %vm317, %v309, 0.0
        %vm320 = vcmask 130048
        %v321 = vsel %vm320, %v318, 0.0
        %v322 = vsel %vm320, %v319, 0.0
        %v323 = vadd.f32 %v321, %v322
        %324 = vadd.xlane.f32.xlu0 %v323
        %v325 = vpop.xlane.xlu0 %324
        %v326 = vrot.slane %v325, 4
        %v327 = vadd.f32 %v325, %v326
        %v328 = vrot.slane %v327, 2
        %v329 = vadd.f32 %v327, %v328
        %v330 = vrot.slane %v329, 1
        %v331 = vadd.f32 %v329, %v330
        %s332 = vtos %v331
        %v333 = vstv %s332
        %vm334 = vcmask 0
        %335 = vst.msk [vmem:[%s233] sm:$0x1] %vm334, %v333
        %vm336 = vcmp.eq.s32.totalorder %v241, 3
        %vm337 = vcmp.eq.s32.totalorder %v242, 3
        %v338 = vsub.f32 1.0, %v237
        %v339 = vsub.f32 1.0, %v238
        %v340 = vsel %vm336, %v338, %v237
        %v341 = vsel %vm337, %v339, %v238
        %v342 = vsel %vm320, %v340, 0.0
        %v343 = vsel %vm320, %v341, 0.0
        %v344 = vadd.f32 %v342, %v343
        %345 = vadd.xlane.f32.xlu0 %v344
        %v346 = vpop.xlane.xlu0 %345
        %v347 = vrot.slane %v346, 4
        %v348 = vadd.f32 %v346, %v347
        %v349 = vrot.slane %v348, 2
        %v350 = vadd.f32 %v348, %v349
        %v351 = vrot.slane %v350, 1
        %v352 = vadd.f32 %v350, %v351
        %s353 = vtos %v352
        %v354 = vstv %s353
        %355 = vst.msk [vmem:[%s236] sm:$0x1] %vm334, %v354
        %p356 = scmp.lt.s32.totalorder %s21, 1
        %s357 = scalar_select %p356, %s21, 1
        %s358 = scalar_lea.vmem %s2, %s357
        %p359 = scmp.lt.s32.totalorder %s21, 1
        %s360 = scalar_select %p359, %s21, 1
        %s361 = scalar_lea.vmem %s3, %s360
        // Predicated region
        $region37: #{tpu_custom_call.1} parent=27 // pred_check
          %p362 = pneg %p91
        $region38: #{tpu_custom_call.1} parent=27 // pred_check_branch
          %364 = sbr.rel (%p362) target = $region40
        $region39: #{tpu_custom_call.1} parent=27 // pred_region
          _
        $region40: #{tpu_custom_call.1} parent=27 // pred_fallthru
          _
        // Predicated region
        $region41: #{tpu_custom_call.1} parent=27 // pred_check
          %p365 = pneg %p117
        $region42: #{tpu_custom_call.1} parent=27 // pred_check_branch
          %367 = sbr.rel (%p365) target = $region44
        $region43: #{tpu_custom_call.1} parent=27 // pred_region
          _
        $region44: #{tpu_custom_call.1} parent=27 // pred_fallthru
          _
      $region28: #{tpu_custom_call.1} parent=5 // pred_fallthru
        _
      %p368 = scmp.le.s32.totalorder 2, %s16
      // Predicated region
      $region45: #{tpu_custom_call.1} parent=5 // pred_check
        %p369 = pneg %p368
      $region46: #{tpu_custom_call.1} parent=5 // pred_check_branch
        %371 = sbr.rel (%p369) target = $region48
      $region47: #{tpu_custom_call.1} parent=5 // pred_region
        %s372 = ssub.s32 %s16, 2
        // Predicated region
        $region49: #{tpu_custom_call.1} parent=47 // pred_check
          %p373 = pneg %p97
        $region50: #{tpu_custom_call.1} parent=47 // pred_check_branch
          %375 = sbr.rel (%p373) target = $region52
        $region51: #{tpu_custom_call.1} parent=47 // pred_region
          %p376 = scmp.lt.s32.totalorder %s22, 1
          %s377 = scalar_select %p376, %s22, 1
          %s378 = scalar_lea.vmem %s2, %s377
        $region52: #{tpu_custom_call.1} parent=47 // pred_fallthru
          _
        // Predicated region
        $region53: #{tpu_custom_call.1} parent=47 // pred_check
          %p379 = pneg %p123
        $region54: #{tpu_custom_call.1} parent=47 // pred_check_branch
          %381 = sbr.rel (%p379) target = $region56
        $region55: #{tpu_custom_call.1} parent=47 // pred_region
          %p382 = scmp.lt.s32.totalorder %s22, 1
          %s383 = scalar_select %p382, %s22, 1
          %s384 = scalar_lea.vmem %s3, %s383
        $region56: #{tpu_custom_call.1} parent=47 // pred_fallthru
          _
      $region48: #{tpu_custom_call.1} parent=5 // pred_fallthru
        _
    $region6: #{tpu_custom_call.1} parent=1 // loop_footer
      %s20 = sadd.s32 1, %s16
    $region7: #{tpu_custom_call.1} parent=1 // loop_footer_branch
      %15 = sbr.rel target = $region3
    $region8: #{tpu_custom_call.1} parent=1 // loop_exit
      _
    %385 = vsyncpa [#allocation3], 1
    %s386 = scalar_lea.sflag [#allocation3], 1
    %387 = vsyncpa %s386, 1
    %388 = vsyncpa [#allocation5], 1
    %s389 = scalar_lea.sflag [#allocation5], 1
    %390 = vsyncpa %s389, 1

</llo_original>
